<compile_context>
chip_gen: v7x
topology: tpu7x:2x2x1
jax: 0.10.0
libtpu: 0.0.40
codegen_flags: <defaults>
</compile_context>

<pallas_src>
import math

import jax
import jax.numpy as jnp
from jax.experimental import pallas as pl
from jax.experimental.pallas import tpu as pltpu


def _make_kernel(mxu_dtype, eps):
    def kernel(x_ref, w1_ref, b1_ref, w2_ref, b2_ref, o_ref):
        x = x_ref[...]                                    # (bm, D), mxu_dtype

        # h = relu(x @ W1 + b1)                           -> (bm, 2D), f32
        h = jnp.dot(x, w1_ref[...],
                    preferred_element_type=jnp.float32) + b1_ref[...]
        h = jnp.maximum(h, 0.0)

        # BertLayerNorm core (TF style, eps inside the sqrt).  gamma/beta are
        # pre-folded into W2/b2 on the host, so only the normalization remains.
        u = jnp.mean(h, axis=-1, keepdims=True)
        xc = h - u
        s = jnp.mean(xc * xc, axis=-1, keepdims=True)
        z = xc * jax.lax.rsqrt(s + eps)

        # Dropout: identity at inference.

        # out = z @ W2' + b2'                             -> (bm, A_pad), f32
        out = jnp.dot(z.astype(mxu_dtype), w2_ref[...],
                      preferred_element_type=jnp.float32) + b2_ref[...]
        o_ref[...] = out.astype(o_ref.dtype)

    return kernel


def _vmem_bytes_estimate(bm, D, H2, A_pad, mxu_itemsize):
    """Rough per-kernel VMEM footprint (double-buffered specs + live f32)."""
    x_bufs = 2 * bm * D * mxu_itemsize
    o_bufs = 2 * bm * A_pad * 4
    w1_bufs = 2 * D * H2 * mxu_itemsize
    w2_bufs = 2 * H2 * A_pad * mxu_itemsize
    bias_bufs = 2 * 2 * (max(H2, 128) + max(A_pad, 128)) * 4
    intermediates = 3 * bm * H2 * 4            # h / xc / z live f32 values
    return x_bufs + o_bufs + w1_bufs + w2_bufs + bias_bufs + intermediates


def output_layer(hidden_states, params, *, block_m=512,
                 mxu_dtype=jnp.bfloat16, eps=1e-12,
                 vmem_cap_bytes=64 * 1024 * 1024):
    """hidden_states: (..., D) -> (..., num_answer).

    params: w1 (D, 2D), b1 (2D,), gamma (2D,), beta (2D,), w2 (2D, A), b2 (A,)
    """
    orig_lead = hidden_states.shape[:-1]
    D = hidden_states.shape[-1]
    H2 = params["w1"].shape[-1]
    A = params["w2"].shape[-1]
    A_pad = ((A + 127) // 128) * 128           # lane-dense output stores
    mxu_itemsize = jnp.dtype(mxu_dtype).itemsize

    # Fold all leading dims into M so the matmuls have a big M dimension.
    x2d = hidden_states.reshape(-1, D)
    M = x2d.shape[0]

    # ---- choose the M-block size ------------------------------------------
    bm = min(block_m, M)
    if bm >= M and M > 8:
        # Keep at least 2 grid steps so both v7x TensorCores get work
        # (neutral on v5e/v6e which have a single TC).
        bm = -(-M // 2)
    if bm < M:
        bm = max(8, ((bm + 7) // 8) * 8)
    # Shrink against the VMEM budget (v7x has only 64 MiB physical per TC).
    while bm > 8 and _vmem_bytes_estimate(bm, D, H2, A_pad,
                                          mxu_itemsize) > vmem_cap_bytes:
        bm = max(8, (((bm // 2) + 7) // 8) * 8)

    Mp = pl.cdiv(M, bm) * bm
    if Mp != M:
        x2d = jnp.pad(x2d, ((0, Mp - M), (0, 0)))

    # ---- one-time host-side weight prep ------------------------------------
    # MXU-dtype operands; gamma/beta folded into the second linear layer:
    #   gamma*z + beta  ->  z @ (diag(gamma) @ W2) + (beta @ W2 + b2)
    x2d = x2d.astype(mxu_dtype)
    w1 = params["w1"].astype(mxu_dtype)
    b1 = params["b1"].reshape(1, H2).astype(jnp.float32)

    gamma = params["gamma"].astype(jnp.float32)
    beta = params["beta"].astype(jnp.float32)
    w2_f32 = params["w2"].astype(jnp.float32)
    w2_fold = gamma[:, None] * w2_f32
    b2_fold = beta @ w2_f32 + params["b2"].astype(jnp.float32)
    if A_pad != A:
        w2_fold = jnp.pad(w2_fold, ((0, 0), (0, A_pad - A)))
        b2_fold = jnp.pad(b2_fold, (0, A_pad - A))
    w2 = w2_fold.astype(mxu_dtype)
    b2 = b2_fold.reshape(1, A_pad).astype(jnp.float32)

    grid = (Mp // bm,)

    grid_spec = pltpu.PrefetchScalarGridSpec(
        num_scalar_prefetch=0,
        grid=grid,
        in_specs=[
            pl.BlockSpec((bm, D), lambda i: (i, 0)),       # x block (streamed)
            pl.BlockSpec((D, H2), lambda i: (0, 0)),       # W1 (resident)
            pl.BlockSpec((1, H2), lambda i: (0, 0)),       # b1 (resident)
            pl.BlockSpec((H2, A_pad), lambda i: (0, 0)),   # W2' (resident)
            pl.BlockSpec((1, A_pad), lambda i: (0, 0)),    # b2' (resident)
        ],
        out_specs=pl.BlockSpec((bm, A_pad), lambda i: (i, 0)),
    )

    # Only raise the scoped-VMEM limit when the estimate actually needs it.
    est = _vmem_bytes_estimate(bm, D, H2, A_pad, mxu_itemsize)
    compiler_kwargs = dict(dimension_semantics=("parallel",))
    if est > 32 * 1024 * 1024:
        compiler_kwargs["vmem_limit_bytes"] = int(
            min(est + (8 << 20), vmem_cap_bytes))

    out = pl.pallas_call(
        _make_kernel(mxu_dtype, eps),
        out_shape=jax.ShapeDtypeStruct((Mp, A_pad), jnp.float32),
        grid_spec=grid_spec,
        compiler_params=pltpu.CompilerParams(**compiler_kwargs),
    )(x2d, w1, b1, w2, b2)

    return out[:M, :A].reshape(orig_lead + (A,))


def output_layer_ref(hidden_states, params, *, eps=1e-12):
    """Pure-JAX reference mirroring the PyTorch OutputLayer (eval mode)."""
    h = jax.nn.relu(hidden_states @ params["w1"] + params["b1"])
    u = jnp.mean(h, axis=-1, keepdims=True)
    s = jnp.mean((h - u) ** 2, axis=-1, keepdims=True)
    hn = (h - u) / jnp.sqrt(s + eps)
    hn = params["gamma"] * hn + params["beta"]
    return hn @ params["w2"] + params["b2"]


if __name__ == "__main__":
    # Small shapes consistent with the module's forward: (batch, seq, hidden).
    batch, seq, hidden_dim, num_answer = 2, 16, 32, 1
    H2 = hidden_dim * 2

    key = jax.random.PRNGKey(0)
    ks = jax.random.split(key, 6)

    hidden_states = jax.random.normal(
        ks[0], (batch, seq, hidden_dim), dtype=jnp.float32)

    def lin_init(k, fan_in, fan_out):
        bound = 1.0 / math.sqrt(fan_in)
        kw, kb = jax.random.split(k)
        w = jax.random.uniform(kw, (fan_in, fan_out), minval=-bound,
                               maxval=bound, dtype=jnp.float32)
        b = jax.random.uniform(kb, (fan_out,), minval=-bound,
                               maxval=bound, dtype=jnp.float32)
        return w, b

    w1, b1 = lin_init(ks[1], hidden_dim, H2)
    w2, b2 = lin_init(ks[2], H2, num_answer)
    # LayerNorm params (perturbed from ones/zeros so the affine fold is tested).
    gamma = 1.0 + 0.1 * jax.random.normal(ks[3], (H2,), dtype=jnp.float32)
    beta = 0.1 * jax.random.normal(ks[4], (H2,), dtype=jnp.float32)

    params = {"w1": w1, "b1": b1, "gamma": gamma, "beta": beta,
              "w2": w2, "b2": b2}

    ref = output_layer_ref(hidden_states, params)

    # Exact-ish check on the f32 MXU path (grid auto-splits to 2 blocks of 16,
    # exercising the blocked/padded path and the lane-dense A padding).
    out_f32 = output_layer(hidden_states, params, mxu_dtype=jnp.float32)
    out_f32 = jax.block_until_ready(out_f32)
    assert out_f32.shape == (batch, seq, num_answer)
    assert jnp.allclose(out_f32, ref, atol=3e-5, rtol=3e-5), \
        "f32 path mismatch vs reference"

    # Default (bf16-fed MXU) path: sanity + tolerance check.
    out_bf16 = output_layer(hidden_states, params)
    out_bf16 = jax.block_until_ready(out_bf16)
    assert out_bf16.shape == (batch, seq, num_answer)
    assert bool(jnp.all(jnp.isfinite(out_bf16)))
    assert float(jnp.max(jnp.abs(out_bf16 - ref))) < 0.1, \
        "bf16 path outside tolerance vs reference"

    print("KERNEL_OK")
</pallas_src>

<mosaic_0001>
module attributes {stable_mosaic.version = 11 : i64} {
  func.func @kernel(%arg0: i32, %arg1: memref<16x32xf32, #tpu.memory_space<vmem>>, %arg2: memref<32x64xf32, #tpu.memory_space<vmem>>, %arg3: memref<1x64xf32, #tpu.memory_space<vmem>>, %arg4: memref<64x128xf32, #tpu.memory_space<vmem>>, %arg5: memref<1x128xf32, #tpu.memory_space<vmem>>, %arg6: memref<16x128xf32, #tpu.memory_space<vmem>>) attributes {dimension_semantics = [#tpu.dimension_semantics<parallel>], iteration_bounds = array<i64: 2>, scalar_prefetch = 0 : i64, scratch_operands = 0 : i64, tpu.core_type = #tpu.core_type<tc>, window_params = [{transform_indices = @transform_0, window_bounds = array<i64: 16, 32>}, {pipeline_mode = #tpu.pipeline_mode<synchronous>, transform_indices = @transform_1, window_bounds = array<i64: 32, 64>}, {pipeline_mode = #tpu.pipeline_mode<synchronous>, transform_indices = @transform_2, window_bounds = array<i64: 1, 64>}, {pipeline_mode = #tpu.pipeline_mode<synchronous>, transform_indices = @transform_3, window_bounds = array<i64: 64, 128>}, {pipeline_mode = #tpu.pipeline_mode<synchronous>, transform_indices = @transform_4, window_bounds = array<i64: 1, 128>}, {transform_indices = @transform_5, window_bounds = array<i64: 16, 128>}]} {
    %c0 = arith.constant 0 : index
    %c0_0 = arith.constant 0 : index
    %0 = vector.load %arg1[%c0, %c0_0] : memref<16x32xf32, #tpu.memory_space<vmem>>, vector<16x32xf32>
    %c0_1 = arith.constant 0 : index
    %c0_2 = arith.constant 0 : index
    %1 = vector.load %arg2[%c0_1, %c0_2] : memref<32x64xf32, #tpu.memory_space<vmem>>, vector<32x64xf32>
    %cst = arith.constant dense<0.000000e+00> : vector<16x64xf32>
    %2 = tpu.matmul %0, %1, %cst {dimension_numbers = #tpu.dot_dimension_numbers<[1], [0], [0], [1], [0, 0, 1, 1], [], []>} : vector<16x32xf32>, vector<32x64xf32>, vector<16x64xf32> -> vector<16x64xf32>
    %c0_3 = arith.constant 0 : index
    %c0_4 = arith.constant 0 : index
    %3 = vector.load %arg3[%c0_3, %c0_4] : memref<1x64xf32, #tpu.memory_space<vmem>>, vector<1x64xf32>
    %4 = vector.broadcast %3 : vector<1x64xf32> to vector<16x64xf32>
    %5 = arith.addf %2, %4 : vector<16x64xf32>
    %cst_5 = arith.constant 0.000000e+00 : f32
    %6 = vector.broadcast %cst_5 : f32 to vector<16x64xf32>
    %7 = arith.maximumf %5, %6 : vector<16x64xf32>
    %cst_6 = arith.constant dense<0.000000e+00> : vector<16xf32>
    %8 = vector.multi_reduction <add>, %7, %cst_6 [1] : vector<16x64xf32> to vector<16xf32>
    %9 = vector.shape_cast %8 : vector<16xf32> to vector<16x1xf32>
    %cst_7 = arith.constant 6.400000e+01 : f32
    %10 = vector.broadcast %cst_7 : f32 to vector<16x1xf32>
    %11 = arith.divf %9, %10 : vector<16x1xf32>
    %12 = vector.broadcast %11 : vector<16x1xf32> to vector<16x64xf32>
    %13 = arith.subf %7, %12 : vector<16x64xf32>
    %14 = arith.mulf %13, %13 : vector<16x64xf32>
    %cst_8 = arith.constant dense<0.000000e+00> : vector<16xf32>
    %15 = vector.multi_reduction <add>, %14, %cst_8 [1] : vector<16x64xf32> to vector<16xf32>
    %16 = vector.shape_cast %15 : vector<16xf32> to vector<16x1xf32>
    %cst_9 = arith.constant 6.400000e+01 : f32
    %17 = vector.broadcast %cst_9 : f32 to vector<16x1xf32>
    %18 = arith.divf %16, %17 : vector<16x1xf32>
    %cst_10 = arith.constant 9.99999996E-13 : f32
    %19 = vector.broadcast %cst_10 : f32 to vector<16x1xf32>
    %20 = arith.addf %18, %19 : vector<16x1xf32>
    %21 = math.rsqrt %20 : vector<16x1xf32>
    %22 = vector.broadcast %21 : vector<16x1xf32> to vector<16x64xf32>
    %23 = arith.mulf %13, %22 : vector<16x64xf32>
    %c0_11 = arith.constant 0 : index
    %c0_12 = arith.constant 0 : index
    %24 = vector.load %arg4[%c0_11, %c0_12] : memref<64x128xf32, #tpu.memory_space<vmem>>, vector<64x128xf32>
    %cst_13 = arith.constant dense<0.000000e+00> : vector<16x128xf32>
    %25 = tpu.matmul %23, %24, %cst_13 {dimension_numbers = #tpu.dot_dimension_numbers<[1], [0], [0], [1], [0, 0, 1, 1], [], []>} : vector<16x64xf32>, vector<64x128xf32>, vector<16x128xf32> -> vector<16x128xf32>
    %c0_14 = arith.constant 0 : index
    %c0_15 = arith.constant 0 : index
    %26 = vector.load %arg5[%c0_14, %c0_15] : memref<1x128xf32, #tpu.memory_space<vmem>>, vector<1x128xf32>
    %27 = vector.broadcast %26 : vector<1x128xf32> to vector<16x128xf32>
    %28 = arith.addf %25, %27 : vector<16x128xf32>
    %c0_16 = arith.constant 0 : index
    %c0_17 = arith.constant 0 : index
    %29 = vector.load %arg6[%c0_16, %c0_17] : memref<16x128xf32, #tpu.memory_space<vmem>>, vector<16x128xf32>
    tpu.vector_store %arg6[%c0_16, %c0_17], %28 {strides = array<i32>} : memref<16x128xf32, #tpu.memory_space<vmem>>, vector<16x128xf32>,
    return
  }
  func.func @transform_0(%arg0: i32) -> (i32, i32) {
    %c0_i32 = arith.constant 0 : i32
    %c0_i32_0 = arith.constant 0 : i32
    return %arg0, %c0_i32 : i32, i32
  }
  func.func @transform_1(%arg0: i32) -> (i32, i32) {
    %c0_i32 = arith.constant 0 : i32
    %c0_i32_0 = arith.constant 0 : i32
    %c0_i32_1 = arith.constant 0 : i32
    return %c0_i32, %c0_i32_0 : i32, i32
  }
  func.func @transform_2(%arg0: i32) -> (i32, i32) {
    %c0_i32 = arith.constant 0 : i32
    %c0_i32_0 = arith.constant 0 : i32
    %c0_i32_1 = arith.constant 0 : i32
    return %c0_i32, %c0_i32_0 : i32, i32
  }
  func.func @transform_3(%arg0: i32) -> (i32, i32) {
    %c0_i32 = arith.constant 0 : i32
    %c0_i32_0 = arith.constant 0 : i32
    %c0_i32_1 = arith.constant 0 : i32
    return %c0_i32, %c0_i32_0 : i32, i32
  }
  func.func @transform_4(%arg0: i32) -> (i32, i32) {
    %c0_i32 = arith.constant 0 : i32
    %c0_i32_0 = arith.constant 0 : i32
    %c0_i32_1 = arith.constant 0 : i32
    return %c0_i32, %c0_i32_0 : i32, i32
  }
  func.func @transform_5(%arg0: i32) -> (i32, i32) {
    %c0_i32 = arith.constant 0 : i32
    %c0_i32_0 = arith.constant 0 : i32
    return %arg0, %c0_i32 : i32, i32
  }
}

</mosaic_0001>

<llo_original>
// kernel: tpu_custom_call.1
$region0: #{tpu_custom_call.1}
  #allocation0 [shape = 'u32[]', space=smem, size = 0x4, offset = 0x4, fixed_abs, tag = 'smem constant byte address 0x4 - core index']
  #allocation1 [shape = 'u32[144,128]{1,0:T(1,128)}', space=vmem, size = 0x12000, scoped, tag = 'internal scratch']
  %s0 = inlined_call_operand.hbm [shape: f32[32,32], index: 0, kind: input, shape index: {}]
  %s1 = inlined_call_operand.hbm [shape: f32[32,64], index: 1, kind: input, shape index: {}]
  %s2 = inlined_call_operand.vmem [shape: f32[1,64], index: 2, kind: input, shape index: {}]
  %s3 = inlined_call_operand.hbm [shape: f32[64,128], index: 3, kind: input, shape index: {}]
  %s4 = inlined_call_operand.vmem [shape: f32[1,128], index: 4, kind: input, shape index: {}]
  %s5 = inlined_call_operand.hbm [shape: f32[32,128], index: 5, kind: output, shape index: {}]
  %s6 = sld [smem:[#allocation0]]
  $region65: #{tpu_custom_call.1} parent=0
    _
  %s8 = ssub.s32 1, %s6
  %s9 = scalar_select 0, %s8, %s6
  $region1: #{tpu_custom_call.1} parent=0
    #allocation2 [shape = 'u8[16384]{0}', space=vmem, size = 0x4000, scoped, tag = 'input window, operand 0']
    #allocation3 [shape = 's32[2]{0}', space=sflag, size = 0x8, scoped, tag = 'scoped memory for tpu_custom_call.1']
    #allocation4 [shape = 's32[2]{0}', space=sflag, size = 0x8, scoped, tag = 'scoped memory for tpu_custom_call.1']
    #allocation5 [shape = 'u8[16384]{0}', space=vmem, size = 0x4000, scoped, tag = 'input window, operand 1, single buffered']
    #allocation6 [shape = 's32[1]{0}', space=sflag, size = 0x4, scoped, tag = 'scoped memory for tpu_custom_call.1']
    #allocation7 [shape = 'u8[32768]{0}', space=vmem, size = 0x8000, scoped, tag = 'input window, operand 3, single buffered']
    #allocation8 [shape = 'u8[16384]{0}', space=vmem, size = 0x4000, scoped, tag = 'output window, operand 0']
    %10 = vsyncpa [#allocation3], 0
    %s11 = scalar_lea.sflag [#allocation3], 1
    %12 = vsyncpa %s11, 0
    %13 = vsyncpa [#allocation6], 0
    %14 = vsyncpa [#allocation4], 0
    %s15 = scalar_lea.sflag [#allocation4], 1
    %16 = vsyncpa %s15, 0
    loop: start=0, step=1, limit=4
    $region2: #{tpu_custom_call.1} parent=1 // loop_pre_header
      _
    $region3: #{tpu_custom_call.1} parent=1 // loop_header
      %s18 = sphi 0, %s22
      %p19 = scmp.ge.s32.totalorder %s18, 4
      %s28 = sphi 0, %s30
      %s31 = sphi 0, %s28
      %s32 = sphi 0, %s31
      %s48 = sphi 0, %s32
      %s52 = sphi 0, %s52
      %s54 = sphi 0, %s52
      %s55 = sphi 0, %s54
      %s69 = sphi 0, %s55
      %s73 = sphi 0, %s73
      %s75 = sphi 0, %s73
      %s76 = sphi 0, %s75
      %s90 = sphi 0, %s76
      %s94 = sphi 0, %s94
      %s96 = sphi 0, %s94
      %s97 = sphi 0, %s96
      %s111 = sphi 0, %s97
      %s115 = sphi 0, %s115
      %s117 = sphi 0, %s115
      %s118 = sphi 0, %s117
      %s132 = sphi 0, %s118
      %s138 = sphi 0, %s140
      %s141 = sphi 0, %s138
      %s142 = sphi 0, %s141
      %s158 = sphi 0, %s142
    $region4: #{tpu_custom_call.1} parent=1 // loop_header_branch
      %21 = sbr.rel (%p19) target = $region8
    $region5: #{tpu_custom_call.1} parent=1 // loop_body
      %s23 = ssub.s32 %s18, 1
      %s24 = ssub.s32 %s18, 2
      %s25 = sadd.s32 %s18, 1
      %s26 = ssub.s32 %s18, %s25
      %p27 = scmp.eq.s32.totalorder %s26, 0
      %s29 = sadd.s32 %s28, 1
      %s30 = scalar_select %p27, %s28, %s29
      %p33 = pneg %p27
      %p34 = scmp.eq.s32.totalorder %s18, 1
      %p35 = por %p33, %p34
      %p36 = scmp.ne.s32.totalorder %s28, %s31
      %p37 = scmp.eq.s32.totalorder %s18, 0
      %p38 = por %p36, %p37
      %p39 = scmp.ne.s32.totalorder %s28, %s31
      %p40 = scmp.eq.s32.totalorder %s23, 1
      %p41 = por %p39, %p40
      %p42 = scmp.ne.s32.totalorder %s31, %s32
      %p43 = scmp.eq.s32.totalorder %s23, 0
      %p44 = por %p42, %p43
      %p45 = scmp.ne.s32.totalorder %s31, %s32
      %p46 = scmp.eq.s32.totalorder %s24, 1
      %p47 = por %p45, %p46
      %p49 = scmp.ne.s32.totalorder %s32, %s48
      %p50 = scmp.eq.s32.totalorder %s24, 0
      %p51 = por %p49, %p50
      %s53 = sadd.s32 %s52, 1
      %p56 = scmp.eq.s32.totalorder %s18, 1
      %p57 = scmp.ne.s32.totalorder %s52, %s54
      %p58 = scmp.eq.s32.totalorder %s18, 0
      %p59 = por %p57, %p58
      %p60 = scmp.ne.s32.totalorder %s52, %s54
      %p61 = scmp.eq.s32.totalorder %s23, 1
      %p62 = por %p60, %p61
      %p63 = scmp.ne.s32.totalorder %s54, %s55
      %p64 = scmp.eq.s32.totalorder %s23, 0
      %p65 = por %p63, %p64
      %p66 = scmp.ne.s32.totalorder %s54, %s55
      %p67 = scmp.eq.s32.totalorder %s24, 1
      %p68 = por %p66, %p67
      %p70 = scmp.ne.s32.totalorder %s55, %s69
      %p71 = scmp.eq.s32.totalorder %s24, 0
      %p72 = por %p70, %p71
      %s74 = sadd.s32 %s73, 1
      %p77 = scmp.eq.s32.totalorder %s18, 1
      %p78 = scmp.ne.s32.totalorder %s73, %s75
      %p79 = scmp.eq.s32.totalorder %s18, 0
      %p80 = por %p78, %p79
      %p81 = scmp.ne.s32.totalorder %s73, %s75
      %p82 = scmp.eq.s32.totalorder %s23, 1
      %p83 = por %p81, %p82
      %p84 = scmp.ne.s32.totalorder %s75, %s76
      %p85 = scmp.eq.s32.totalorder %s23, 0
      %p86 = por %p84, %p85
      %p87 = scmp.ne.s32.totalorder %s75, %s76
      %p88 = scmp.eq.s32.totalorder %s24, 1
      %p89 = por %p87, %p88
      %p91 = scmp.ne.s32.totalorder %s76, %s90
      %p92 = scmp.eq.s32.totalorder %s24, 0
      %p93 = por %p91, %p92
      %s95 = sadd.s32 %s94, 1
      %p98 = scmp.eq.s32.totalorder %s18, 1
      %p99 = scmp.ne.s32.totalorder %s94, %s96
      %p100 = scmp.eq.s32.totalorder %s18, 0
      %p101 = por %p99, %p100
      %p102 = scmp.ne.s32.totalorder %s94, %s96
      %p103 = scmp.eq.s32.totalorder %s23, 1
      %p104 = por %p102, %p103
      %p105 = scmp.ne.s32.totalorder %s96, %s97
      %p106 = scmp.eq.s32.totalorder %s23, 0
      %p107 = por %p105, %p106
      %p108 = scmp.ne.s32.totalorder %s96, %s97
      %p109 = scmp.eq.s32.totalorder %s24, 1
      %p110 = por %p108, %p109
      %p112 = scmp.ne.s32.totalorder %s97, %s111
      %p113 = scmp.eq.s32.totalorder %s24, 0
      %p114 = por %p112, %p113
      %s116 = sadd.s32 %s115, 1
      %p119 = scmp.eq.s32.totalorder %s18, 1
      %p120 = scmp.ne.s32.totalorder %s115, %s117
      %p121 = scmp.eq.s32.totalorder %s18, 0
      %p122 = por %p120, %p121
      %p123 = scmp.ne.s32.totalorder %s115, %s117
      %p124 = scmp.eq.s32.totalorder %s23, 1
      %p125 = por %p123, %p124
      %p126 = scmp.ne.s32.totalorder %s117, %s118
      %p127 = scmp.eq.s32.totalorder %s23, 0
      %p128 = por %p126, %p127
      %p129 = scmp.ne.s32.totalorder %s117, %s118
      %p130 = scmp.eq.s32.totalorder %s24, 1
      %p131 = por %p129, %p130
      %p133 = scmp.ne.s32.totalorder %s118, %s132
      %p134 = scmp.eq.s32.totalorder %s24, 0
      %p135 = por %p133, %p134
      %s136 = ssub.s32 %s18, %s25
      %p137 = scmp.eq.s32.totalorder %s136, 0
      %s139 = sadd.s32 %s138, 1
      %s140 = scalar_select %p137, %s138, %s139
      %p143 = pneg %p137
      %p144 = scmp.eq.s32.totalorder %s18, 1
      %p145 = por %p143, %p144
      %p146 = scmp.ne.s32.totalorder %s138, %s141
      %p147 = scmp.eq.s32.totalorder %s18, 0
      %p148 = por %p146, %p147
      %p149 = scmp.ne.s32.totalorder %s138, %s141
      %p150 = scmp.eq.s32.totalorder %s23, 1
      %p151 = por %p149, %p150
      %p152 = scmp.ne.s32.totalorder %s141, %s142
      %p153 = scmp.eq.s32.totalorder %s23, 0
      %p154 = por %p152, %p153
      %p155 = scmp.ne.s32.totalorder %s141, %s142
      %p156 = scmp.eq.s32.totalorder %s24, 1
      %p157 = por %p155, %p156
      %p159 = scmp.ne.s32.totalorder %s142, %s158
      %p160 = scmp.eq.s32.totalorder %s24, 0
      %p161 = por %p159, %p160
      %p162 = scmp.le.s32.totalorder 1, %s18
      %p163 = scmp.lt.s32.totalorder %s18, 3
      %p164 = pnand %p162, %p163
      %p165 = pneg %p164
      // Predicated region
      $region9: #{tpu_custom_call.1} parent=5 // pred_check
        _
      $region10: #{tpu_custom_call.1} parent=5 // pred_check_branch
        %167 = sbr.rel (%p164) target = $region12
      $region11: #{tpu_custom_call.1} parent=5 // pred_region
        %s168 = ssub.s32 %s18, 1
        // Predicated region
        $region13: #{tpu_custom_call.1} parent=11 // pred_check
          %p169 = pneg %p65
        $region14: #{tpu_custom_call.1} parent=11 // pred_check_branch
          %171 = sbr.rel (%p169) target = $region16
        $region15: #{tpu_custom_call.1} parent=11 // pred_region
          %s173 = ssub.s32 512, 512
          %174 = vsyncadd [#allocation6], %s173
          %s175 = sshll.u32 [#allocation5], 4
          %s176 = int_to_ptr.vmem [resolvable:$true] %s175
          %181 = dma.hbm_to_vmem [thread:$0]  %s1, 512, %s176, [#allocation6], 128, 128, 8
        $region16: #{tpu_custom_call.1} parent=11 // pred_fallthru
          _
        // Predicated region
        $region17: #{tpu_custom_call.1} parent=11 // pred_check
          %p182 = pneg %p86
        $region18: #{tpu_custom_call.1} parent=11 // pred_check_branch
          %184 = sbr.rel (%p182) target = $region20
        $region19: #{tpu_custom_call.1} parent=11 // pred_region
          _
        $region20: #{tpu_custom_call.1} parent=11 // pred_fallthru
          _
        // Predicated region
        $region21: #{tpu_custom_call.1} parent=11 // pred_check
          %p185 = pneg %p107
        $region22: #{tpu_custom_call.1} parent=11 // pred_check_branch
          %187 = sbr.rel (%p185) target = $region24
        $region23: #{tpu_custom_call.1} parent=11 // pred_region
          %s189 = ssub.s32 1024, 1024
          %190 = vsyncadd [#allocation6], %s189
          %s191 = sshll.u32 [#allocation7], 4
          %s192 = int_to_ptr.vmem [resolvable:$true] %s191
          %197 = dma.hbm_to_vmem [thread:$0]  %s3, 1024, %s192, [#allocation6], 128, 128, 8
        $region24: #{tpu_custom_call.1} parent=11 // pred_fallthru
          _
        // Predicated region
        $region25: #{tpu_custom_call.1} parent=11 // pred_check
          %p198 = pneg %p128
        $region26: #{tpu_custom_call.1} parent=11 // pred_check_branch
          %200 = sbr.rel (%p198) target = $region28
        $region27: #{tpu_custom_call.1} parent=11 // pred_region
          _
        $region28: #{tpu_custom_call.1} parent=11 // pred_fallthru
          _
      $region12: #{tpu_custom_call.1} parent=5 // pred_fallthru
        _
      %p201 = scmp.lt.s32.totalorder %s18, 2
      // Predicated region
      $region29: #{tpu_custom_call.1} parent=5 // pred_check
        %p202 = pneg %p201
      $region30: #{tpu_custom_call.1} parent=5 // pred_check_branch
        %204 = sbr.rel (%p202) target = $region32
      $region31: #{tpu_custom_call.1} parent=5 // pred_region
        // Predicated region
        $region33: #{tpu_custom_call.1} parent=31 // pred_check
          %p205 = pneg %p38
        $region34: #{tpu_custom_call.1} parent=31 // pred_check_branch
          %207 = sbr.rel (%p205) target = $region36
        $region35: #{tpu_custom_call.1} parent=31 // pred_region
          %s208 = sand.u32 %s28, 1
          %s209 = scalar_lea.sflag [#allocation3], %s208
          %s210 = sand.u32 %s28, 1
          %s211 = smul.addr %s210, 16
          %s212 = scalar_lea.vmem [#allocation2], %s211
          %s213 = smul.u32 2, %s18
          %s215 = ssub.s32 256, 256
          %216 = vsyncadd %s209, %s215
          %s217 = smul.addr %s213, 128
          %s218 = scalar_lea.hbm %s0, %s217
          %s219 = sshll.u32 %s212, 4
          %s220 = int_to_ptr.vmem [resolvable:$true] %s219
          %225 = dma.hbm_to_vmem [thread:$0]  %s218, 256, %s220, %s209, 128, 128, 8
        $region36: #{tpu_custom_call.1} parent=31 // pred_fallthru
          _
      $region32: #{tpu_custom_call.1} parent=5 // pred_fallthru
        _
      %p226 = scmp.le.s32.totalorder 1, %s18
      %p227 = scmp.lt.s32.totalorder %s18, 3
      %p228 = pnand %p226, %p227
      %p229 = pneg %p228
      // Predicated region
      $region37: #{tpu_custom_call.1} parent=5 // pred_check
        _
      $region38: #{tpu_custom_call.1} parent=5 // pred_check_branch
        %231 = sbr.rel (%p228) target = $region40
      $region39: #{tpu_custom_call.1} parent=5 // pred_region
        %s232 = ssub.s32 %s18, 1
        %s233 = sand.u32 %s31, 1
        %s234 = scalar_lea.sflag [#allocation3], %s233
        %s235 = sand.u32 %s31, 1
        %s236 = smul.addr %s235, 16
        %s237 = scalar_lea.vmem [#allocation2], %s236
        // Predicated region
        $region41: #{tpu_custom_call.1} parent=39 // pred_check
          %p238 = pneg %p44
        $region42: #{tpu_custom_call.1} parent=39 // pred_check_branch
          %240 = sbr.rel (%p238) target = $region44
        $region43: #{tpu_custom_call.1} parent=39 // pred_region
          %241 = dma.done %s234, 256
        $region44: #{tpu_custom_call.1} parent=39 // pred_fallthru
          _
        // Predicated region
        $region45: #{tpu_custom_call.1} parent=39 // pred_check
          %p242 = pneg %p65
        $region46: #{tpu_custom_call.1} parent=39 // pred_check_branch
          %244 = sbr.rel (%p242) target = $region48
        $region47: #{tpu_custom_call.1} parent=39 // pred_region
          %245 = dma.done [#allocation6], 512
        $region48: #{tpu_custom_call.1} parent=39 // pred_fallthru
          _
        // Predicated region
        $region49: #{tpu_custom_call.1} parent=39 // pred_check
          %p246 = pneg %p107
        $region50: #{tpu_custom_call.1} parent=39 // pred_check_branch
          %248 = sbr.rel (%p246) target = $region52
        $region51: #{tpu_custom_call.1} parent=39 // pred_region
          %249 = dma.done [#allocation6], 1024
        $region52: #{tpu_custom_call.1} parent=39 // pred_fallthru
          _
        %s250 = sand.u32 %s31, 1
        %s251 = scalar_lea.sflag [#allocation3], %s250
        %s252 = sand.u32 %s31, 1
        %s253 = smul.addr %s252, 16
        %s254 = scalar_lea.vmem [#allocation2], %s253
        %p255 = pneg %p44
        %p256 = pneg %p41
        %p257 = pneg %p65
        %p258 = pneg %p62
        %p259 = pneg %p86
        %p260 = pneg %p83
        %p261 = pneg %p107
        %p262 = pneg %p104
        %p263 = pneg %p128
        %p264 = pneg %p125
        %p265 = pneg %p154
        %p266 = pneg %p151
        %s267 = sand.u32 %s141, 1
        %s268 = scalar_lea.sflag [#allocation4], %s267
        %s269 = sand.u32 %s141, 1
        %s270 = smul.addr %s269, 16
        %s271 = scalar_lea.vmem [#allocation8], %s270
        %s272 = smul.u32 2, %s23
        %s273 = smul.u32 2, %s23
        %v274 = vld [vmem:[%s237] sm:$0xff]
        %v275 = vld [vmem:[%s237 + $0x8] sm:$0xff]
        %v276 = vld [vmem:[#allocation5] sm:$0xff]
        %v277 = vld [vmem:[#allocation5 + $0x8] sm:$0xff]
        %v278 = vld [vmem:[#allocation5 + $0x10] sm:$0xff]
        %v279 = vld [vmem:[#allocation5 + $0x18] sm:$0xff]
        %v280 = vld [vmem:[%s2] sm:$0x1]
        %v282 = vlaneseq
        %v283 = vshrl.u32 %v282, 7
        %v284 = vsub.s32 0, %v283
        %v285 = vrot.slane %v280, %v284
        %vm287 = vcmask 261120
        %v289 = vsel %vm287, %v274, 0
        %v292 = vsel %vm287, %v275, 0
        %294 = vmatprep.subr.mxu0 0.0
        %295 = vmatpush1.msra.mxu0 %v276
        %296 = vmatprep.subr.mxu0 0.0
        %297 = vmatpush1.msra.mxu0 %v277
        %298 = vmatprep.subr.mxu0 0.0
        %299 = vmatpush1.msra.mxu0 %v278
        %300 = vmatprep.subr.mxu0 0.0
        %301 = vmatpush1.msra.mxu0 %v279
        %302 = vmatprep.subr.mxu0 0.0
        %303 = vmatpush1.msra.mxu0 0.0
        %304 = vmatprep.subr.mxu0 0.0
        %305 = vmatpush1.msra.mxu0 0.0
        %306 = vmatprep.subr.mxu0 0.0
        %307 = vmatpush1.msra.mxu0 0.0
        %308 = vmatprep.subr.mxu0 0.0
        %309 = vmatpush1.msra.mxu0 0.0
        %310 = vmatprep.subr.mxu0 0.0
        %311 = vmatpush1.msra.mxu0 0.0
        %312 = vmatprep.subr.mxu0 0.0
        %313 = vmatpush1.msra.mxu0 0.0
        %314 = vmatprep.subr.mxu0 0.0
        %315 = vmatpush1.msra.mxu0 0.0
        %316 = vmatprep.subr.mxu0 0.0
        %317 = vmatpush1.msra.mxu0 0.0
        %318 = vmatprep.subr.mxu0 0.0
        %319 = vmatpush1.msra.mxu0 0.0
        %320 = vmatprep.subr.mxu0 0.0
        %321 = vmatpush1.msra.mxu0 0.0
        %322 = vmatprep.subr.mxu0 0.0
        %323 = vmatpush1.msra.mxu0 0.0
        %324 = vmatprep.subr.mxu0 0.0
        %325 = vmatpush1.msra.mxu0 0.0
        %326 = vmatprep.subr.mxu0 0.0
        %327 = vmatpush1.msra.mxu0 0.0
        %328 = vmatprep.subr.mxu0 0.0
        %329 = vmatpush1.msra.mxu0 0.0
        %330 = vmatprep.subr.mxu0 0.0
        %331 = vmatpush1.msra.mxu0 0.0
        %332 = vmatprep.subr.mxu0 0.0
        %333 = vmatpush1.msra.mxu0 0.0
        %334 = vmatprep.subr.mxu0 0.0
        %335 = vmatpush1.msra.mxu0 0.0
        %336 = vmatprep.subr.mxu0 0.0
        %337 = vmatpush1.msra.mxu0 0.0
        %338 = vmatprep.subr.mxu0 0.0
        %339 = vmatpush1.msra.mxu0 0.0
        %340 = vmatprep.subr.mxu0 0.0
        %341 = vmatpush1.msra.mxu0 0.0
        %342 = vmatprep.subr.mxu0 0.0
        %343 = vmatpush1.msra.mxu0 0.0
        %344 = vmatprep.subr.mxu0 0.0
        %345 = vmatpush1.msra.mxu0 0.0
        %346 = vmatprep.subr.mxu0 0.0
        %347 = vmatpush1.msra.mxu0 0.0
        %348 = vmatprep.subr.mxu0 0.0
        %349 = vmatpush1.msra.mxu0 0.0
        %350 = vmatprep.subr.mxu0 0.0
        %351 = vmatpush1.msra.mxu0 0.0
        %352 = vmatprep.subr.mxu0 0.0
        %353 = vmatpush1.msra.mxu0 0.0
        %354 = vmatprep.subr.mxu0 0.0
        %355 = vmatpush1.msra.mxu0 0.0
        %356 = vmatprep.subr.mxu0 0.0
        %357 = vmatpush1.msra.mxu0 0.0
        %358 = vmatprep.mubr.f32.mxu0 0.0
        %359 = vmatmul.mubr.f32.gmra.mrb[0].mxu0 %v289
        %v360 = vpop.f32.mrb[0].mxu0
        %v361 = vadd.f32 %v285, %v360
        %v362 = vpop.f32.mrb[0].mxu0
        %363 = vmatprep.mubr.f32.mxu0 0.0
        %364 = vmatmul.mubr.f32.gmra.mrb[0].mxu0 %v292
        %v365 = vpop.f32.mrb[0].mxu0
        %v366 = vadd.f32 %v285, %v365
        %v367 = vpop.f32.mrb[0].mxu0
        %368 = vdwg.mxu0
        %v369 = vmax.f32 %v361, 0.0
        %v370 = vmax.f32 %v366, 0.0
        %vm371 = vcmask 523264
        %v372 = vsel %vm371, %v369, 0.0
        %373 = vadd.xlane.f32.xlu0 %v372
        %v374 = vpop.xlane.xlu0 %373
        %v375 = vsel %vm371, %v370, 0.0
        %376 = vadd.xlane.f32.xlu0 %v375
        %v377 = vpop.xlane.xlu0 %376
        %v378 = vrcp.pop 64.0
        %v379 = vmul.f32 %v374, %v378
        %v380 = vmul.f32 %v377, %v378
        %v381 = vsub.f32 %v369, %v379
        %v382 = vsub.f32 %v370, %v380
        %v383 = vmul.f32 %v381, %v381
        %v384 = vmul.f32 %v382, %v382
        %v385 = vsel %vm371, %v383, 0.0
        %386 = vadd.xlane.f32.xlu0 %v385
        %v387 = vpop.xlane.xlu0 %386
        %v388 = vsel %vm371, %v384, 0.0
        %389 = vadd.xlane.f32.xlu0 %v388
        %v390 = vpop.xlane.xlu0 %389
        %v391 = vmul.f32 %v387, %v378
        %v392 = vmul.f32 %v390, %v378
        %v393 = vadd.f32 %v391, 1e-12
        %v394 = vadd.f32 %v392, 1e-12
        %v395 = vrsqrt.pop %v393
        %v396 = vrsqrt.pop %v394
        %v397 = vmul.f32 %v381, %v395
        %v398 = vmul.f32 %v382, %v396
        %v399 = vld [vmem:[#allocation7] sm:$0xff]
        %v400 = vld [vmem:[#allocation7 + $0x8] sm:$0xff]
        %v401 = vld [vmem:[#allocation7 + $0x10] sm:$0xff]
        %v402 = vld [vmem:[#allocation7 + $0x18] sm:$0xff]
        %v403 = vld [vmem:[#allocation7 + $0x20] sm:$0xff]
        %v404 = vld [vmem:[#allocation7 + $0x28] sm:$0xff]
        %v405 = vld [vmem:[#allocation7 + $0x30] sm:$0xff]
        %v406 = vld [vmem:[#allocation7 + $0x38] sm:$0xff]
        %v407 = vld [vmem:[%s4] sm:$0x1]
        %v409 = vlaneseq
        %v410 = vshrl.u32 %v409, 7
        %v411 = vsub.s32 0, %v410
        %v412 = vrot.slane %v407, %v411
        %v415 = vsel %vm371, %v397, 0
        %v418 = vsel %vm371, %v398, 0
        %420 = vmatprep.subr.mxu0 0.0
        %421 = vmatpush1.msra.mxu0 %v399
        %422 = vmatprep.subr.mxu0 0.0
        %423 = vmatpush1.msra.mxu0 %v400
        %424 = vmatprep.subr.mxu0 0.0
        %425 = vmatpush1.msra.mxu0 %v401
        %426 = vmatprep.subr.mxu0 0.0
        %427 = vmatpush1.msra.mxu0 %v402
        %428 = vmatprep.subr.mxu0 0.0
        %429 = vmatpush1.msra.mxu0 %v403
        %430 = vmatprep.subr.mxu0 0.0
        %431 = vmatpush1.msra.mxu0 %v404
        %432 = vmatprep.subr.mxu0 0.0
        %433 = vmatpush1.msra.mxu0 %v405
        %434 = vmatprep.subr.mxu0 0.0
        %435 = vmatpush1.msra.mxu0 %v406
        %436 = vmatprep.subr.mxu0 0.0
        %437 = vmatpush1.msra.mxu0 0.0
        %438 = vmatprep.subr.mxu0 0.0
        %439 = vmatpush1.msra.mxu0 0.0
        %440 = vmatprep.subr.mxu0 0.0
        %441 = vmatpush1.msra.mxu0 0.0
        %442 = vmatprep.subr.mxu0 0.0
        %443 = vmatpush1.msra.mxu0 0.0
        %444 = vmatprep.subr.mxu0 0.0
        %445 = vmatpush1.msra.mxu0 0.0
        %446 = vmatprep.subr.mxu0 0.0
        %447 = vmatpush1.msra.mxu0 0.0
        %448 = vmatprep.subr.mxu0 0.0
        %449 = vmatpush1.msra.mxu0 0.0
        %450 = vmatprep.subr.mxu0 0.0
        %451 = vmatpush1.msra.mxu0 0.0
        %452 = vmatprep.subr.mxu0 0.0
        %453 = vmatpush1.msra.mxu0 0.0
        %454 = vmatprep.subr.mxu0 0.0
        %455 = vmatpush1.msra.mxu0 0.0
        %456 = vmatprep.subr.mxu0 0.0
        %457 = vmatpush1.msra.mxu0 0.0
        %458 = vmatprep.subr.mxu0 0.0
        %459 = vmatpush1.msra.mxu0 0.0
        %460 = vmatprep.subr.mxu0 0.0
        %461 = vmatpush1.msra.mxu0 0.0
        %462 = vmatprep.subr.mxu0 0.0
        %463 = vmatpush1.msra.mxu0 0.0
        %464 = vmatprep.subr.mxu0 0.0
        %465 = vmatpush1.msra.mxu0 0.0
        %466 = vmatprep.subr.mxu0 0.0
        %467 = vmatpush1.msra.mxu0 0.0
        %468 = vmatprep.subr.mxu0 0.0
        %469 = vmatpush1.msra.mxu0 0.0
        %470 = vmatprep.subr.mxu0 0.0
        %471 = vmatpush1.msra.mxu0 0.0
        %472 = vmatprep.subr.mxu0 0.0
        %473 = vmatpush1.msra.mxu0 0.0
        %474 = vmatprep.subr.mxu0 0.0
        %475 = vmatpush1.msra.mxu0 0.0
        %476 = vmatprep.subr.mxu0 0.0
        %477 = vmatpush1.msra.mxu0 0.0
        %478 = vmatprep.subr.mxu0 0.0
        %479 = vmatpush1.msra.mxu0 0.0
        %480 = vmatprep.subr.mxu0 0.0
        %481 = vmatpush1.msra.mxu0 0.0
        %482 = vmatprep.subr.mxu0 0.0
        %483 = vmatpush1.msra.mxu0 0.0
        %484 = vmatprep.mubr.f32.mxu0 0.0
        %485 = vmatmul.mubr.f32.gmra.mrb[0].mxu0 %v415
        %v486 = vpop.f32.mrb[0].mxu0
        %v487 = vadd.f32 %v412, %v486
        %v488 = vpop.f32.mrb[0].mxu0
        %489 = vmatprep.mubr.f32.mxu0 0.0
        %490 = vmatmul.mubr.f32.gmra.mrb[0].mxu0 %v418
        %v491 = vpop.f32.mrb[0].mxu0
        %v492 = vadd.f32 %v412, %v491
        %v493 = vpop.f32.mrb[0].mxu0
        %494 = vdwg.mxu0
        %495 = vst [vmem:[%s271] sm:$0xff] %v487
        %496 = vst [vmem:[%s271 + $0x8] sm:$0xff] %v492
        %s497 = sand.u32 %s141, 1
        %s498 = scalar_lea.sflag [#allocation4], %s497
        %s499 = sand.u32 %s141, 1
        %s500 = smul.addr %s499, 16
        %s501 = scalar_lea.vmem [#allocation8], %s500
        // Predicated region
        $region53: #{tpu_custom_call.1} parent=39 // pred_check
          %p502 = pneg %p151
        $region54: #{tpu_custom_call.1} parent=39 // pred_check_branch
          %504 = sbr.rel (%p502) target = $region56
        $region55: #{tpu_custom_call.1} parent=39 // pred_region
          %s505 = smul.u32 2, %s23
          %s507 = ssub.s32 256, 256
          %508 = vsyncadd %s498, %s507
          %s509 = smul.addr %s505, 128
          %s510 = scalar_lea.hbm %s5, %s509
          %s511 = sshll.u32 %s501, 4
          %s512 = int_to_ptr.vmem [resolvable:$true] %s511
          %517 = dma.vmem_to_hbm [thread:$0]  %s512, 256, %s510, %s498, 128, 128, 8
        $region56: #{tpu_custom_call.1} parent=39 // pred_fallthru
          _
      $region40: #{tpu_custom_call.1} parent=5 // pred_fallthru
        _
      %p518 = scmp.le.s32.totalorder 2, %s18
      // Predicated region
      $region57: #{tpu_custom_call.1} parent=5 // pred_check
        %p519 = pneg %p518
      $region58: #{tpu_custom_call.1} parent=5 // pred_check_branch
        %521 = sbr.rel (%p519) target = $region60
      $region59: #{tpu_custom_call.1} parent=5 // pred_region
        %s522 = ssub.s32 %s18, 2
        // Predicated region
        $region61: #{tpu_custom_call.1} parent=59 // pred_check
          %p523 = pneg %p157
        $region62: #{tpu_custom_call.1} parent=59 // pred_check_branch
          %525 = sbr.rel (%p523) target = $region64
        $region63: #{tpu_custom_call.1} parent=59 // pred_region
          %s526 = sand.u32 %s142, 1
          %s527 = scalar_lea.sflag [#allocation4], %s526
          %s528 = sand.u32 %s142, 1
          %s529 = smul.addr %s528, 16
          %s530 = scalar_lea.vmem [#allocation8], %s529
          %531 = dma.done %s527, 256
        $region64: #{tpu_custom_call.1} parent=59 // pred_fallthru
          _
      $region60: #{tpu_custom_call.1} parent=5 // pred_fallthru
        _
    $region6: #{tpu_custom_call.1} parent=1 // loop_footer
      %s22 = sadd.s32 1, %s18
    $region7: #{tpu_custom_call.1} parent=1 // loop_footer_branch
      %17 = sbr.rel target = $region3
    $region8: #{tpu_custom_call.1} parent=1 // loop_exit
      _
    %532 = vsyncpa [#allocation3], 1
    %s533 = scalar_lea.sflag [#allocation3], 1
    %534 = vsyncpa %s533, 1
    %535 = vsyncpa [#allocation6], 1
    %536 = vsyncpa [#allocation4], 1
    %s537 = scalar_lea.sflag [#allocation4], 1
    %538 = vsyncpa %s537, 1

</llo_original>
